<compile_context>
chip_gen: v7x
topology: tpu7x:2x2x1
jax: 0.10.0
libtpu: 0.0.40
codegen_flags: <defaults>
</compile_context>

<pallas_src>
import functools

import jax
import jax.numpy as jnp
from jax import lax
from jax.experimental import pallas as pl
from jax.experimental.pallas import tpu as pltpu


def _round_up(a, m):
    return ((a + m - 1) // m) * m


def _pooled_sum(ids, table_ref, *, vocab_base, vocab_chunk, dp):
    """sum_t table[done[:, t]] + sum_t table[todo[:, t]] for this vocab window.

    ids:       (TN, 2*Tp) int32 token ids (done ++ todo), already loaded
    table_ref: (TV, Dp)   embedding-table tile Ref (f32 or bf16)
    returns    (TN, Dp)   f32 partial pooled sum
    """
    tn, n_ids = ids.shape
    tv = table_ref.shape[0]
    acc = jnp.zeros((tn, dp), jnp.float32)
    for c in range(tv // vocab_chunk):                      # static, small
        base = c * vocab_chunk
        vocab_ids = (lax.broadcasted_iota(jnp.int32, (tn, vocab_chunk), 1)
                     + vocab_base + base)
        # counts in f32 (exact integers, native VALU); cast ONCE before dot.
        counts = jnp.zeros((tn, vocab_chunk), jnp.float32)
        for t in range(n_ids):                              # 2*Tp, unrolled
            counts = counts + (ids[:, t:t + 1] == vocab_ids).astype(jnp.float32)
        acc = acc + jnp.dot(counts.astype(table_ref.dtype),
                            table_ref[base:base + vocab_chunk, :],
                            preferred_element_type=jnp.float32)
    return acc


def _finalize(acc, type_row, gamma, beta, *, inv_tp, inv_d, eps, d_true):
    """mean-pool scaling + type embedding + LayerNorm over the true demb."""
    x = acc * inv_tp + type_row
    # Padded lanes of x are exactly 0 (table columns / type padding are 0), so
    # sum / true-D is the exact mean.  Variance uses the two-pass (x - mu)^2
    # form with the padded lanes masked out (matches PyTorch LayerNorm).
    mu = jnp.sum(x, axis=-1, keepdims=True) * inv_d
    lane = lax.broadcasted_iota(jnp.int32, (1, x.shape[1]), 1)
    xc = jnp.where(lane < d_true, x - mu, 0.0)
    var = jnp.sum(xc * xc, axis=-1, keepdims=True) * inv_d
    y = (x - mu) * lax.rsqrt(var + eps)
    return y * gamma + beta


def _resident_kernel(ids_ref, table_ref, type_ref, gamma_ref, beta_ref,
                     out_ref, *, inv_tp, inv_d, eps, d_true, vocab_chunk):
    # FAST path: whole table VMEM-resident, 1-D grid over N tiles only.
    acc = _pooled_sum(ids_ref[...], table_ref, vocab_base=0,
                      vocab_chunk=vocab_chunk, dp=out_ref.shape[1])
    out_ref[...] = _finalize(acc, type_ref[...], gamma_ref[...], beta_ref[...],
                             inv_tp=inv_tp, inv_d=inv_d, eps=eps,
                             d_true=d_true).astype(out_ref.dtype)


def _streaming_kernel(ids_ref, table_ref, type_ref, gamma_ref, beta_ref,
                      out_ref, *, inv_tp, inv_d, eps, d_true, vocab_chunk):
    # STREAM path: grid = (N tiles ["parallel"], V tiles ["arbitrary"]).
    # The f32 output block (constant index over k) is the resident accumulator.
    k = pl.program_id(1)

    @pl.when(k == 0)
    def _():
        out_ref[...] = jnp.zeros_like(out_ref)

    tv = table_ref.shape[0]
    out_ref[...] += _pooled_sum(ids_ref[...], table_ref, vocab_base=k * tv,
                                vocab_chunk=vocab_chunk, dp=out_ref.shape[1])

    @pl.when(k == pl.num_programs(1) - 1)
    def _():
        out_ref[...] = _finalize(out_ref[...], type_ref[...], gamma_ref[...],
                                 beta_ref[...], inv_tp=inv_tp, inv_d=inv_d,
                                 eps=eps, d_true=d_true).astype(out_ref.dtype)


def _default_vmem_budget_bytes():
    # ~60% of physical VMEM: v7x 64 MiB/TC -> ~38 MiB; v5e/v6e 128 MiB -> ~76 MiB.
    try:
        cap = pltpu.get_tpu_info().vmem_capacity_bytes
    except Exception:
        cap = 64 * 1024 * 1024            # conservative default = v7x
    return int(cap * 0.6)


def encoder_intent_forward(intent_done, intent_todo, emb_table, type_emb,
                           ln_gamma, ln_beta, *, tile_n=256, tile_v=512,
                           mxu_dtype=jnp.bfloat16, eps=1e-5,
                           vmem_budget_bytes=None, force_stream=False):
    B, T, Tp = intent_done.shape
    N = B * T
    V, D = emb_table.shape

    Dp = _round_up(D, 128)

    # --- N tiling ("parallel" axis); prefer >= 2 tiles so v7x uses both TCs.
    TN = min(tile_n, _round_up(N, 8))
    while TN > 8 and _round_up(N, TN) // TN < 2:
        TN //= 2
    TN = max(8, _round_up(TN, 8))
    Np = _round_up(N, TN)

    # --- vocab sub-chunk for the counts build: live (TN, chunk) f32 counts
    #     tile stays <= 32 vregs (half the register file).
    chunk = 128 if TN >= 256 else 256
    chunk = min(chunk, _round_up(V, 128))
    Vp = _round_up(V, chunk)

    itemsize = jnp.dtype(mxu_dtype).itemsize
    if vmem_budget_bytes is None:
        vmem_budget_bytes = _default_vmem_budget_bytes()

    # Non-table VMEM footprint: double-buffered ids & out blocks, params, margin.
    common_bytes = (2 * TN * 2 * Tp * 4 + 2 * TN * Dp * 4 + 6 * Dp * 4
                    + (2 << 20))
    resident_table_bytes = 2 * Vp * Dp * itemsize     # allow double buffering
    use_resident = (not force_stream and
                    resident_table_bytes + common_bytes <= vmem_budget_bytes)

    # --- pack / pad operands (lane-dense, zero-padded).
    ids = jnp.concatenate(
        [intent_done.reshape(N, Tp), intent_todo.reshape(N, Tp)],
        axis=1).astype(jnp.int32)
    ids = jnp.pad(ids, ((0, Np - N), (0, 0)))
    type_sum = jnp.pad(
        (type_emb[0] + type_emb[1]).reshape(1, D).astype(jnp.float32),
        ((0, 0), (0, Dp - D)))
    gamma_p = jnp.pad(ln_gamma.reshape(1, D).astype(jnp.float32),
                      ((0, 0), (0, Dp - D)))
    beta_p = jnp.pad(ln_beta.reshape(1, D).astype(jnp.float32),
                     ((0, 0), (0, Dp - D)))

    kern_kwargs = dict(inv_tp=1.0 / Tp, inv_d=1.0 / D, eps=eps,
                       d_true=D, vocab_chunk=chunk)

    if use_resident:
        table_p = jnp.pad(emb_table, ((0, Vp - V), (0, Dp - D))).astype(mxu_dtype)
        grid = (Np // TN,)
        in_specs = [
            pl.BlockSpec((TN, 2 * Tp), lambda i: (i, 0)),    # done ++ todo ids
            pl.BlockSpec((Vp, Dp), lambda i: (0, 0)),        # resident table
            pl.BlockSpec((1, Dp), lambda i: (0, 0)),         # type0 + type1
            pl.BlockSpec((1, Dp), lambda i: (0, 0)),         # LN gamma
            pl.BlockSpec((1, Dp), lambda i: (0, 0)),         # LN beta
        ]
        out_spec = pl.BlockSpec((TN, Dp), lambda i: (i, 0))
        kernel = functools.partial(_resident_kernel, **kern_kwargs)
        dim_sem = ("parallel",)
        vmem_needed = resident_table_bytes + common_bytes
    else:
        TV = min(_round_up(tile_v, chunk), Vp)
        Vp = _round_up(V, TV)
        table_p = jnp.pad(emb_table, ((0, Vp - V), (0, Dp - D))).astype(mxu_dtype)
        grid = (Np // TN, Vp // TV)
        in_specs = [
            pl.BlockSpec((TN, 2 * Tp), lambda i, k: (i, 0)),
            pl.BlockSpec((TV, Dp), lambda i, k: (k, 0)),
            pl.BlockSpec((1, Dp), lambda i, k: (0, 0)),
            pl.BlockSpec((1, Dp), lambda i, k: (0, 0)),
            pl.BlockSpec((1, Dp), lambda i, k: (0, 0)),
        ]
        out_spec = pl.BlockSpec((TN, Dp), lambda i, k: (i, 0))
        kernel = functools.partial(_streaming_kernel, **kern_kwargs)
        dim_sem = ("parallel", "arbitrary")
        vmem_needed = 2 * TV * Dp * itemsize + common_bytes

    vmem_limit = int(max(32 * 1024 * 1024, vmem_needed + (4 << 20)))

    out = pl.pallas_call(
        kernel,
        out_shape=jax.ShapeDtypeStruct((Np, Dp), jnp.float32),
        grid_spec=pltpu.PrefetchScalarGridSpec(
            num_scalar_prefetch=0,
            grid=grid,
            in_specs=in_specs,
            out_specs=out_spec,
        ),
        compiler_params=pltpu.CompilerParams(
            dimension_semantics=dim_sem,
            vmem_limit_bytes=vmem_limit,
        ),
    )(ids, table_p, type_sum, gamma_p, beta_p)

    if Np == N and Dp == D:
        return out.reshape(B, T, D)
    return out[:N, :D].reshape(B, T, D)


def encoder_intent_reference(intent_done, intent_todo, emb_table, type_emb,
                             ln_gamma, ln_beta, eps=1e-5):
    # Pure-JAX reference mirroring the PyTorch forward (eval mode).
    def branch(ids, pos):
        e = jnp.take(emb_table, ids, axis=0)                  # (B, T, Tp, D)
        return e.mean(axis=-2) + type_emb[pos]                # (B, T, D)
    x = branch(intent_done, 0) + branch(intent_todo, 1)
    mu = x.mean(-1, keepdims=True)
    var = ((x - mu) ** 2).mean(-1, keepdims=True)
    return (x - mu) * lax.rsqrt(var + eps) * ln_gamma + ln_beta


if __name__ == "__main__":
    key = jax.random.PRNGKey(0)

    # ---- config 1: small shapes implied by the module forward -------------
    B, T, Tp = 2, 4, 8
    vocab, demb = 64, 32
    k_tab, k_type, k_done, k_todo, key = jax.random.split(key, 5)

    emb_table = jax.random.normal(k_tab, (vocab, demb), jnp.float32) * 0.02
    type_emb = jax.random.normal(k_type, (2, demb), jnp.float32) * 0.02
    ln_gamma = jnp.ones((demb,), jnp.float32)
    ln_beta = jnp.zeros((demb,), jnp.float32)
    intent_done = jax.random.randint(k_done, (B, T, Tp), 0, vocab, jnp.int32)
    intent_todo = jax.random.randint(k_todo, (B, T, Tp), 0, vocab, jnp.int32)

    ref = encoder_intent_reference(intent_done, intent_todo, emb_table,
                                   type_emb, ln_gamma, ln_beta)

    # default (bf16 MXU, VMEM-resident table fast path)
    out_bf16 = jax.block_until_ready(
        encoder_intent_forward(intent_done, intent_todo, emb_table, type_emb,
                               ln_gamma, ln_beta))
    assert out_bf16.shape == (B, T, demb)
    assert jnp.allclose(out_bf16, ref, atol=5e-2, rtol=5e-2)

    # f32 verification path (resident table)
    out_f32 = jax.block_until_ready(
        encoder_intent_forward(intent_done, intent_todo, emb_table, type_emb,
                               ln_gamma, ln_beta, mxu_dtype=jnp.float32))
    assert jnp.allclose(out_f32, ref, atol=1e-4, rtol=1e-4)

    # ---- config 2: exercise the streaming (vocab-reduction) path ----------
    B2, T2, Tp2 = 2, 3, 5
    vocab2, demb2 = 320, 48
    k_tab2, k_type2, k_done2, k_todo2, key = jax.random.split(key, 5)

    emb_table2 = jax.random.normal(k_tab2, (vocab2, demb2), jnp.float32) * 0.02
    type_emb2 = jax.random.normal(k_type2, (2, demb2), jnp.float32) * 0.02
    ln_gamma2 = 1.0 + 0.1 * jax.random.normal(key, (demb2,), jnp.float32)
    ln_beta2 = jnp.zeros((demb2,), jnp.float32)
    intent_done2 = jax.random.randint(k_done2, (B2, T2, Tp2), 0, vocab2, jnp.int32)
    intent_todo2 = jax.random.randint(k_todo2, (B2, T2, Tp2), 0, vocab2, jnp.int32)

    ref2 = encoder_intent_reference(intent_done2, intent_todo2, emb_table2,
                                    type_emb2, ln_gamma2, ln_beta2)

    # forced streaming path (multi-step vocab reduction, f32)
    out_stream = jax.block_until_ready(
        encoder_intent_forward(intent_done2, intent_todo2, emb_table2,
                               type_emb2, ln_gamma2, ln_beta2,
                               mxu_dtype=jnp.float32, tile_v=256,
                               force_stream=True))
    assert out_stream.shape == (B2, T2, demb2)
    assert jnp.allclose(out_stream, ref2, atol=1e-4, rtol=1e-4)

    # same config through the default resident fast path (bf16)
    out_res2 = jax.block_until_ready(
        encoder_intent_forward(intent_done2, intent_todo2, emb_table2,
                               type_emb2, ln_gamma2, ln_beta2))
    assert jnp.allclose(out_res2, ref2, atol=5e-2, rtol=5e-2)

    print("KERNEL_OK")
</pallas_src>

<mosaic_0001>
module attributes {stable_mosaic.version = 11 : i64} {
  func.func @_resident_kernel(%arg0: i32, %arg1: memref<8x16xi32, #tpu.memory_space<vmem>>, %arg2: memref<128x128xbf16, #tpu.memory_space<vmem>>, %arg3: memref<1x128xf32, #tpu.memory_space<vmem>>, %arg4: memref<1x128xf32, #tpu.memory_space<vmem>>, %arg5: memref<1x128xf32, #tpu.memory_space<vmem>>, %arg6: memref<8x128xf32, #tpu.memory_space<vmem>>) attributes {dimension_semantics = [#tpu.dimension_semantics<parallel>], iteration_bounds = array<i64: 1>, scalar_prefetch = 0 : i64, scratch_operands = 0 : i64, tpu.core_type = #tpu.core_type<tc>, window_params = [{transform_indices = @transform_0, window_bounds = array<i64: 8, 16>}, {pipeline_mode = #tpu.pipeline_mode<synchronous>, transform_indices = @transform_1, window_bounds = array<i64: 128, 128>}, {pipeline_mode = #tpu.pipeline_mode<synchronous>, transform_indices = @transform_2, window_bounds = array<i64: 1, 128>}, {pipeline_mode = #tpu.pipeline_mode<synchronous>, transform_indices = @transform_3, window_bounds = array<i64: 1, 128>}, {pipeline_mode = #tpu.pipeline_mode<synchronous>, transform_indices = @transform_4, window_bounds = array<i64: 1, 128>}, {transform_indices = @transform_5, window_bounds = array<i64: 8, 128>}]} {
    %c0 = arith.constant 0 : index
    %c0_0 = arith.constant 0 : index
    %0 = vector.load %arg1[%c0, %c0_0] : memref<8x16xi32, #tpu.memory_space<vmem>>, vector<8x16xi32>
    %cst = arith.constant 0.000000e+00 : f32
    %1 = vector.broadcast %cst : f32 to vector<8x128xf32>
    %2 = tpu.iota {dimensions = array<i32: 1>} : vector<8x128xi32>
    %c0_i32 = arith.constant 0 : i32
    %3 = vector.broadcast %c0_i32 : i32 to vector<8x128xi32>
    %4 = arith.addi %2, %3 : vector<8x128xi32>
    %c0_i32_1 = arith.constant 0 : i32
    %5 = vector.broadcast %c0_i32_1 : i32 to vector<8x128xi32>
    %6 = arith.addi %4, %5 : vector<8x128xi32>
    %cst_2 = arith.constant 0.000000e+00 : f32
    %7 = vector.broadcast %cst_2 : f32 to vector<8x128xf32>
    %8 = vector.extract_strided_slice %0 {offsets = [0, 0], sizes = [8, 1], strides = [1, 1]} : vector<8x16xi32> to vector<8x1xi32>
    %9 = vector.broadcast %8 : vector<8x1xi32> to vector<8x128xi32>
    %10 = arith.cmpi eq, %9, %6 : vector<8x128xi32>
    %11 = arith.extui %10 : vector<8x128xi1> to vector<8x128xi32>
    %12 = arith.sitofp %11 : vector<8x128xi32> to vector<8x128xf32>
    %13 = arith.addf %7, %12 : vector<8x128xf32>
    %14 = vector.extract_strided_slice %0 {offsets = [0, 1], sizes = [8, 1], strides = [1, 1]} : vector<8x16xi32> to vector<8x1xi32>
    %15 = vector.broadcast %14 : vector<8x1xi32> to vector<8x128xi32>
    %16 = arith.cmpi eq, %15, %6 : vector<8x128xi32>
    %17 = arith.extui %16 : vector<8x128xi1> to vector<8x128xi32>
    %18 = arith.sitofp %17 : vector<8x128xi32> to vector<8x128xf32>
    %19 = arith.addf %13, %18 : vector<8x128xf32>
    %20 = vector.extract_strided_slice %0 {offsets = [0, 2], sizes = [8, 1], strides = [1, 1]} : vector<8x16xi32> to vector<8x1xi32>
    %21 = vector.broadcast %20 : vector<8x1xi32> to vector<8x128xi32>
    %22 = arith.cmpi eq, %21, %6 : vector<8x128xi32>
    %23 = arith.extui %22 : vector<8x128xi1> to vector<8x128xi32>
    %24 = arith.sitofp %23 : vector<8x128xi32> to vector<8x128xf32>
    %25 = arith.addf %19, %24 : vector<8x128xf32>
    %26 = vector.extract_strided_slice %0 {offsets = [0, 3], sizes = [8, 1], strides = [1, 1]} : vector<8x16xi32> to vector<8x1xi32>
    %27 = vector.broadcast %26 : vector<8x1xi32> to vector<8x128xi32>
    %28 = arith.cmpi eq, %27, %6 : vector<8x128xi32>
    %29 = arith.extui %28 : vector<8x128xi1> to vector<8x128xi32>
    %30 = arith.sitofp %29 : vector<8x128xi32> to vector<8x128xf32>
    %31 = arith.addf %25, %30 : vector<8x128xf32>
    %32 = vector.extract_strided_slice %0 {offsets = [0, 4], sizes = [8, 1], strides = [1, 1]} : vector<8x16xi32> to vector<8x1xi32>
    %33 = vector.broadcast %32 : vector<8x1xi32> to vector<8x128xi32>
    %34 = arith.cmpi eq, %33, %6 : vector<8x128xi32>
    %35 = arith.extui %34 : vector<8x128xi1> to vector<8x128xi32>
    %36 = arith.sitofp %35 : vector<8x128xi32> to vector<8x128xf32>
    %37 = arith.addf %31, %36 : vector<8x128xf32>
    %38 = vector.extract_strided_slice %0 {offsets = [0, 5], sizes = [8, 1], strides = [1, 1]} : vector<8x16xi32> to vector<8x1xi32>
    %39 = vector.broadcast %38 : vector<8x1xi32> to vector<8x128xi32>
    %40 = arith.cmpi eq, %39, %6 : vector<8x128xi32>
    %41 = arith.extui %40 : vector<8x128xi1> to vector<8x128xi32>
    %42 = arith.sitofp %41 : vector<8x128xi32> to vector<8x128xf32>
    %43 = arith.addf %37, %42 : vector<8x128xf32>
    %44 = vector.extract_strided_slice %0 {offsets = [0, 6], sizes = [8, 1], strides = [1, 1]} : vector<8x16xi32> to vector<8x1xi32>
    %45 = vector.broadcast %44 : vector<8x1xi32> to vector<8x128xi32>
    %46 = arith.cmpi eq, %45, %6 : vector<8x128xi32>
    %47 = arith.extui %46 : vector<8x128xi1> to vector<8x128xi32>
    %48 = arith.sitofp %47 : vector<8x128xi32> to vector<8x128xf32>
    %49 = arith.addf %43, %48 : vector<8x128xf32>
    %50 = vector.extract_strided_slice %0 {offsets = [0, 7], sizes = [8, 1], strides = [1, 1]} : vector<8x16xi32> to vector<8x1xi32>
    %51 = vector.broadcast %50 : vector<8x1xi32> to vector<8x128xi32>
    %52 = arith.cmpi eq, %51, %6 : vector<8x128xi32>
    %53 = arith.extui %52 : vector<8x128xi1> to vector<8x128xi32>
    %54 = arith.sitofp %53 : vector<8x128xi32> to vector<8x128xf32>
    %55 = arith.addf %49, %54 : vector<8x128xf32>
    %56 = vector.extract_strided_slice %0 {offsets = [0, 8], sizes = [8, 1], strides = [1, 1]} : vector<8x16xi32> to vector<8x1xi32>
    %57 = vector.broadcast %56 : vector<8x1xi32> to vector<8x128xi32>
    %58 = arith.cmpi eq, %57, %6 : vector<8x128xi32>
    %59 = arith.extui %58 : vector<8x128xi1> to vector<8x128xi32>
    %60 = arith.sitofp %59 : vector<8x128xi32> to vector<8x128xf32>
    %61 = arith.addf %55, %60 : vector<8x128xf32>
    %62 = vector.extract_strided_slice %0 {offsets = [0, 9], sizes = [8, 1], strides = [1, 1]} : vector<8x16xi32> to vector<8x1xi32>
    %63 = vector.broadcast %62 : vector<8x1xi32> to vector<8x128xi32>
    %64 = arith.cmpi eq, %63, %6 : vector<8x128xi32>
    %65 = arith.extui %64 : vector<8x128xi1> to vector<8x128xi32>
    %66 = arith.sitofp %65 : vector<8x128xi32> to vector<8x128xf32>
    %67 = arith.addf %61, %66 : vector<8x128xf32>
    %68 = vector.extract_strided_slice %0 {offsets = [0, 10], sizes = [8, 1], strides = [1, 1]} : vector<8x16xi32> to vector<8x1xi32>
    %69 = vector.broadcast %68 : vector<8x1xi32> to vector<8x128xi32>
    %70 = arith.cmpi eq, %69, %6 : vector<8x128xi32>
    %71 = arith.extui %70 : vector<8x128xi1> to vector<8x128xi32>
    %72 = arith.sitofp %71 : vector<8x128xi32> to vector<8x128xf32>
    %73 = arith.addf %67, %72 : vector<8x128xf32>
    %74 = vector.extract_strided_slice %0 {offsets = [0, 11], sizes = [8, 1], strides = [1, 1]} : vector<8x16xi32> to vector<8x1xi32>
    %75 = vector.broadcast %74 : vector<8x1xi32> to vector<8x128xi32>
    %76 = arith.cmpi eq, %75, %6 : vector<8x128xi32>
    %77 = arith.extui %76 : vector<8x128xi1> to vector<8x128xi32>
    %78 = arith.sitofp %77 : vector<8x128xi32> to vector<8x128xf32>
    %79 = arith.addf %73, %78 : vector<8x128xf32>
    %80 = vector.extract_strided_slice %0 {offsets = [0, 12], sizes = [8, 1], strides = [1, 1]} : vector<8x16xi32> to vector<8x1xi32>
    %81 = vector.broadcast %80 : vector<8x1xi32> to vector<8x128xi32>
    %82 = arith.cmpi eq, %81, %6 : vector<8x128xi32>
    %83 = arith.extui %82 : vector<8x128xi1> to vector<8x128xi32>
    %84 = arith.sitofp %83 : vector<8x128xi32> to vector<8x128xf32>
    %85 = arith.addf %79, %84 : vector<8x128xf32>
    %86 = vector.extract_strided_slice %0 {offsets = [0, 13], sizes = [8, 1], strides = [1, 1]} : vector<8x16xi32> to vector<8x1xi32>
    %87 = vector.broadcast %86 : vector<8x1xi32> to vector<8x128xi32>
    %88 = arith.cmpi eq, %87, %6 : vector<8x128xi32>
    %89 = arith.extui %88 : vector<8x128xi1> to vector<8x128xi32>
    %90 = arith.sitofp %89 : vector<8x128xi32> to vector<8x128xf32>
    %91 = arith.addf %85, %90 : vector<8x128xf32>
    %92 = vector.extract_strided_slice %0 {offsets = [0, 14], sizes = [8, 1], strides = [1, 1]} : vector<8x16xi32> to vector<8x1xi32>
    %93 = vector.broadcast %92 : vector<8x1xi32> to vector<8x128xi32>
    %94 = arith.cmpi eq, %93, %6 : vector<8x128xi32>
    %95 = arith.extui %94 : vector<8x128xi1> to vector<8x128xi32>
    %96 = arith.sitofp %95 : vector<8x128xi32> to vector<8x128xf32>
    %97 = arith.addf %91, %96 : vector<8x128xf32>
    %98 = vector.extract_strided_slice %0 {offsets = [0, 15], sizes = [8, 1], strides = [1, 1]} : vector<8x16xi32> to vector<8x1xi32>
    %99 = vector.broadcast %98 : vector<8x1xi32> to vector<8x128xi32>
    %100 = arith.cmpi eq, %99, %6 : vector<8x128xi32>
    %101 = arith.extui %100 : vector<8x128xi1> to vector<8x128xi32>
    %102 = arith.sitofp %101 : vector<8x128xi32> to vector<8x128xf32>
    %103 = arith.addf %97, %102 : vector<8x128xf32>
    %104 = arith.truncf %103 : vector<8x128xf32> to vector<8x128xbf16>
    %c0_3 = arith.constant 0 : index
    %c0_4 = arith.constant 0 : index
    %105 = vector.load %arg2[%c0_3, %c0_4] : memref<128x128xbf16, #tpu.memory_space<vmem>>, vector<128x128xbf16>
    %cst_5 = arith.constant dense<0.000000e+00> : vector<8x128xf32>
    %106 = tpu.matmul %104, %105, %cst_5 {dimension_numbers = #tpu.dot_dimension_numbers<[1], [0], [0], [1], [0, 0, 1, 1], [], []>} : vector<8x128xbf16>, vector<128x128xbf16>, vector<8x128xf32> -> vector<8x128xf32>
    %107 = arith.addf %1, %106 : vector<8x128xf32>
    %c0_6 = arith.constant 0 : index
    %c0_7 = arith.constant 0 : index
    %108 = vector.load %arg3[%c0_6, %c0_7] : memref<1x128xf32, #tpu.memory_space<vmem>>, vector<1x128xf32>
    %c0_8 = arith.constant 0 : index
    %c0_9 = arith.constant 0 : index
    %109 = vector.load %arg4[%c0_8, %c0_9] : memref<1x128xf32, #tpu.memory_space<vmem>>, vector<1x128xf32>
    %c0_10 = arith.constant 0 : index
    %c0_11 = arith.constant 0 : index
    %110 = vector.load %arg5[%c0_10, %c0_11] : memref<1x128xf32, #tpu.memory_space<vmem>>, vector<1x128xf32>
    %cst_12 = arith.constant 1.250000e-01 : f32
    %111 = vector.broadcast %cst_12 : f32 to vector<8x128xf32>
    %112 = arith.mulf %107, %111 : vector<8x128xf32>
    %113 = vector.broadcast %108 : vector<1x128xf32> to vector<8x128xf32>
    %114 = arith.addf %112, %113 : vector<8x128xf32>
    %cst_13 = arith.constant dense<0.000000e+00> : vector<8xf32>
    %115 = vector.multi_reduction <add>, %114, %cst_13 [1] : vector<8x128xf32> to vector<8xf32>
    %116 = vector.shape_cast %115 : vector<8xf32> to vector<8x1xf32>
    %cst_14 = arith.constant 3.125000e-02 : f32
    %117 = vector.broadcast %cst_14 : f32 to vector<8x1xf32>
    %118 = arith.mulf %116, %117 : vector<8x1xf32>
    %119 = tpu.iota {dimensions = array<i32: 1>} : vector<1x128xi32>
    %c32_i32 = arith.constant 32 : i32
    %120 = vector.broadcast %c32_i32 : i32 to vector<1x128xi32>
    %121 = arith.cmpi slt, %119, %120 : vector<1x128xi32>
    %122 = vector.broadcast %118 : vector<8x1xf32> to vector<8x128xf32>
    %123 = arith.subf %114, %122 : vector<8x128xf32>
    %cst_15 = arith.constant 0.000000e+00 : f32
    %124 = vector.shape_cast %121 : vector<1x128xi1> to vector<1x128xi1>
    %125 = vector.broadcast %124 : vector<1x128xi1> to vector<8x128xi1>
    %126 = vector.broadcast %cst_15 : f32 to vector<8x128xf32>
    %127 = arith.select %125, %123, %126 : vector<8x128xi1>, vector<8x128xf32>
    %128 = arith.mulf %127, %127 : vector<8x128xf32>
    %cst_16 = arith.constant dense<0.000000e+00> : vector<8xf32>
    %129 = vector.multi_reduction <add>, %128, %cst_16 [1] : vector<8x128xf32> to vector<8xf32>
    %130 = vector.shape_cast %129 : vector<8xf32> to vector<8x1xf32>
    %cst_17 = arith.constant 3.125000e-02 : f32
    %131 = vector.broadcast %cst_17 : f32 to vector<8x1xf32>
    %132 = arith.mulf %130, %131 : vector<8x1xf32>
    %133 = vector.broadcast %118 : vector<8x1xf32> to vector<8x128xf32>
    %134 = arith.subf %114, %133 : vector<8x128xf32>
    %cst_18 = arith.constant 9.99999974E-6 : f32
    %135 = vector.broadcast %cst_18 : f32 to vector<8x1xf32>
    %136 = arith.addf %132, %135 : vector<8x1xf32>
    %137 = math.rsqrt %136 : vector<8x1xf32>
    %138 = vector.broadcast %137 : vector<8x1xf32> to vector<8x128xf32>
    %139 = arith.mulf %134, %138 : vector<8x128xf32>
    %140 = vector.broadcast %109 : vector<1x128xf32> to vector<8x128xf32>
    %141 = arith.mulf %139, %140 : vector<8x128xf32>
    %142 = vector.broadcast %110 : vector<1x128xf32> to vector<8x128xf32>
    %143 = arith.addf %141, %142 : vector<8x128xf32>
    %c0_19 = arith.constant 0 : index
    %c0_20 = arith.constant 0 : index
    %144 = vector.load %arg6[%c0_19, %c0_20] : memref<8x128xf32, #tpu.memory_space<vmem>>, vector<8x128xf32>
    tpu.vector_store %arg6[%c0_19, %c0_20], %143 {strides = array<i32>} : memref<8x128xf32, #tpu.memory_space<vmem>>, vector<8x128xf32>,
    return
  }
  func.func @transform_0(%arg0: i32) -> (i32, i32) {
    %c0_i32 = arith.constant 0 : i32
    %c0_i32_0 = arith.constant 0 : i32
    return %arg0, %c0_i32 : i32, i32
  }
  func.func @transform_1(%arg0: i32) -> (i32, i32) {
    %c0_i32 = arith.constant 0 : i32
    %c0_i32_0 = arith.constant 0 : i32
    %c0_i32_1 = arith.constant 0 : i32
    return %c0_i32, %c0_i32_0 : i32, i32
  }
  func.func @transform_2(%arg0: i32) -> (i32, i32) {
    %c0_i32 = arith.constant 0 : i32
    %c0_i32_0 = arith.constant 0 : i32
    %c0_i32_1 = arith.constant 0 : i32
    return %c0_i32, %c0_i32_0 : i32, i32
  }
  func.func @transform_3(%arg0: i32) -> (i32, i32) {
    %c0_i32 = arith.constant 0 : i32
    %c0_i32_0 = arith.constant 0 : i32
    %c0_i32_1 = arith.constant 0 : i32
    return %c0_i32, %c0_i32_0 : i32, i32
  }
  func.func @transform_4(%arg0: i32) -> (i32, i32) {
    %c0_i32 = arith.constant 0 : i32
    %c0_i32_0 = arith.constant 0 : i32
    %c0_i32_1 = arith.constant 0 : i32
    return %c0_i32, %c0_i32_0 : i32, i32
  }
  func.func @transform_5(%arg0: i32) -> (i32, i32) {
    %c0_i32 = arith.constant 0 : i32
    %c0_i32_0 = arith.constant 0 : i32
    return %arg0, %c0_i32 : i32, i32
  }
}

</mosaic_0001>

<llo_original>
// kernel: tpu_custom_call.1
$region0: #{tpu_custom_call.1}
  #allocation0 [shape = 'u32[]', space=smem, size = 0x4, offset = 0x4, fixed_abs, tag = 'smem constant byte address 0x4 - core index']
  #allocation1 [shape = 'u32[144,128]{1,0:T(1,128)}', space=vmem, size = 0x12000, scoped, tag = 'internal scratch']
  %s0 = inlined_call_operand.hbm [shape: s32[8,16], index: 0, kind: input, shape index: {}]
  %s1 = inlined_call_operand.hbm [shape: bf16[128,128], index: 1, kind: input, shape index: {}]
  %s2 = inlined_call_operand.vmem [shape: f32[1,128], index: 2, kind: input, shape index: {}]
  %s3 = inlined_call_operand.vmem [shape: f32[1,128], index: 3, kind: input, shape index: {}]
  %s4 = inlined_call_operand.vmem [shape: f32[1,128], index: 4, kind: input, shape index: {}]
  %s5 = inlined_call_operand.hbm [shape: f32[8,128], index: 5, kind: output, shape index: {}]
  %s6 = sld [smem:[#allocation0]]
  $region38: #{tpu_custom_call.1} parent=0
    _
  %s8 = ssub.s32 1, %s6
  %s9 = scalar_select 0, %s8, %s6
  $region1: #{tpu_custom_call.1} parent=0
    #allocation2 [shape = 'u8[4096]{0}', space=vmem, size = 0x1000, scoped, tag = 'input window, operand 0, single buffered']
    #allocation3 [shape = 's32[1]{0}', space=sflag, size = 0x4, scoped, tag = 'scoped memory for tpu_custom_call.1']
    #allocation4 [shape = 's32[1]{0}', space=sflag, size = 0x4, scoped, tag = 'scoped memory for tpu_custom_call.1']
    #allocation5 [shape = 'u8[32768]{0}', space=vmem, size = 0x8000, scoped, tag = 'input window, operand 1, single buffered']
    #allocation6 [shape = 's32[1]{0}', space=sflag, size = 0x4, scoped, tag = 'scoped memory for tpu_custom_call.1']
    #allocation7 [shape = 'u8[4096]{0}', space=vmem, size = 0x1000, scoped, tag = 'output window, operand 0, single buffered']
    %10 = vsyncpa [#allocation3], 0
    %11 = vsyncpa [#allocation6], 0
    %12 = vsyncpa [#allocation4], 0
    // Predicated region
    $region2: #{tpu_custom_call.1} parent=1 // pred_check
      _
    $region3: #{tpu_custom_call.1} parent=1 // pred_check_branch
      %14 = sbr.rel (0) target = $region5
    $region4: #{tpu_custom_call.1} parent=1 // pred_region
      %s16 = ssub.s32 128, 128
      %17 = vsyncadd [#allocation3], %s16
      %s19 = sshll.u32 [#allocation2], 4
      %s20 = int_to_ptr.vmem [resolvable:$true] %s19
      %22 = dma.hbm_to_vmem [thread:$0]  %s0, 128, %s20, [#allocation3]
    $region5: #{tpu_custom_call.1} parent=1 // pred_fallthru
      _
    // Predicated region
    $region6: #{tpu_custom_call.1} parent=1 // pred_check
      _
    $region7: #{tpu_custom_call.1} parent=1 // pred_check_branch
      %24 = sbr.rel (0) target = $region9
    $region8: #{tpu_custom_call.1} parent=1 // pred_region
      %s26 = ssub.s32 1024, 1024
      %27 = vsyncadd [#allocation6], %s26
      %s28 = sshll.u32 [#allocation5], 4
      %s29 = int_to_ptr.vmem [resolvable:$true] %s28
      %34 = dma.hbm_to_vmem [thread:$0]  %s1, 1024, %s29, [#allocation6], 64, 64, 4
    $region9: #{tpu_custom_call.1} parent=1 // pred_fallthru
      _
    // Predicated region
    $region10: #{tpu_custom_call.1} parent=1 // pred_check
      _
    $region11: #{tpu_custom_call.1} parent=1 // pred_check_branch
      %36 = sbr.rel (0) target = $region13
    $region12: #{tpu_custom_call.1} parent=1 // pred_region
      _
    $region13: #{tpu_custom_call.1} parent=1 // pred_fallthru
      _
    // Predicated region
    $region14: #{tpu_custom_call.1} parent=1 // pred_check
      _
    $region15: #{tpu_custom_call.1} parent=1 // pred_check_branch
      %38 = sbr.rel (0) target = $region17
    $region16: #{tpu_custom_call.1} parent=1 // pred_region
      _
    $region17: #{tpu_custom_call.1} parent=1 // pred_fallthru
      _
    // Predicated region
    $region18: #{tpu_custom_call.1} parent=1 // pred_check
      _
    $region19: #{tpu_custom_call.1} parent=1 // pred_check_branch
      %40 = sbr.rel (0) target = $region21
    $region20: #{tpu_custom_call.1} parent=1 // pred_region
      _
    $region21: #{tpu_custom_call.1} parent=1 // pred_fallthru
      _
    // Predicated region
    $region22: #{tpu_custom_call.1} parent=1 // pred_check
      _
    $region23: #{tpu_custom_call.1} parent=1 // pred_check_branch
      %42 = sbr.rel (0) target = $region25
    $region24: #{tpu_custom_call.1} parent=1 // pred_region
      %43 = dma.done [#allocation3], 128
    $region25: #{tpu_custom_call.1} parent=1 // pred_fallthru
      _
    // Predicated region
    $region26: #{tpu_custom_call.1} parent=1 // pred_check
      _
    $region27: #{tpu_custom_call.1} parent=1 // pred_check_branch
      %45 = sbr.rel (0) target = $region29
    $region28: #{tpu_custom_call.1} parent=1 // pred_region
      %46 = dma.done [#allocation6], 1024
    $region29: #{tpu_custom_call.1} parent=1 // pred_fallthru
      _
    %v48 = vld [vmem:[#allocation2] sm:$0xff]
    %v49 = vlaneseq
    %v50 = vand.u32 %v49, 127
    %51 = vset.pattern.permute.xlu0 0
    %52 = vperm.xlu0 %51, %v48
    %v53 = vpop.permute.xlu0 %52
    %vm54 = vcmp.eq.s32.totalorder %v53, %v50
    %v55 = vsel %vm54, 1, 0
    %v56 = vcvt.s32.f32 %v55
    %v57 = vadd.f32 %v56, 0.0
    %58 = vset.pattern.permute.xlu0 1
    %59 = vperm.xlu0 %58, %v48
    %v60 = vpop.permute.xlu0 %59
    %vm61 = vcmp.eq.s32.totalorder %v60, %v50
    %v62 = vsel %vm61, 1, 0
    %v63 = vcvt.s32.f32 %v62
    %v64 = vadd.f32 %v57, %v63
    %65 = vset.pattern.permute.xlu0 2
    %66 = vperm.xlu0 %65, %v48
    %v67 = vpop.permute.xlu0 %66
    %vm68 = vcmp.eq.s32.totalorder %v67, %v50
    %v69 = vsel %vm68, 1, 0
    %v70 = vcvt.s32.f32 %v69
    %v71 = vadd.f32 %v64, %v70
    %72 = vset.pattern.permute.xlu0 3
    %73 = vperm.xlu0 %72, %v48
    %v74 = vpop.permute.xlu0 %73
    %vm75 = vcmp.eq.s32.totalorder %v74, %v50
    %v76 = vsel %vm75, 1, 0
    %v77 = vcvt.s32.f32 %v76
    %v78 = vadd.f32 %v71, %v77
    %79 = vset.pattern.permute.xlu0 4
    %80 = vperm.xlu0 %79, %v48
    %v81 = vpop.permute.xlu0 %80
    %vm82 = vcmp.eq.s32.totalorder %v81, %v50
    %v83 = vsel %vm82, 1, 0
    %v84 = vcvt.s32.f32 %v83
    %v85 = vadd.f32 %v78, %v84
    %86 = vset.pattern.permute.xlu0 5
    %87 = vperm.xlu0 %86, %v48
    %v88 = vpop.permute.xlu0 %87
    %vm89 = vcmp.eq.s32.totalorder %v88, %v50
    %v90 = vsel %vm89, 1, 0
    %v91 = vcvt.s32.f32 %v90
    %v92 = vadd.f32 %v85, %v91
    %93 = vset.pattern.permute.xlu0 6
    %94 = vperm.xlu0 %93, %v48
    %v95 = vpop.permute.xlu0 %94
    %vm96 = vcmp.eq.s32.totalorder %v95, %v50
    %v97 = vsel %vm96, 1, 0
    %v98 = vcvt.s32.f32 %v97
    %v99 = vadd.f32 %v92, %v98
    %100 = vset.pattern.permute.xlu0 7
    %101 = vperm.xlu0 %100, %v48
    %v102 = vpop.permute.xlu0 %101
    %vm103 = vcmp.eq.s32.totalorder %v102, %v50
    %v104 = vsel %vm103, 1, 0
    %v105 = vcvt.s32.f32 %v104
    %v106 = vadd.f32 %v99, %v105
    %107 = vset.pattern.permute.xlu0 8
    %108 = vperm.xlu0 %107, %v48
    %v109 = vpop.permute.xlu0 %108
    %vm110 = vcmp.eq.s32.totalorder %v109, %v50
    %v111 = vsel %vm110, 1, 0
    %v112 = vcvt.s32.f32 %v111
    %v113 = vadd.f32 %v106, %v112
    %114 = vset.pattern.permute.xlu0 9
    %115 = vperm.xlu0 %114, %v48
    %v116 = vpop.permute.xlu0 %115
    %vm117 = vcmp.eq.s32.totalorder %v116, %v50
    %v118 = vsel %vm117, 1, 0
    %v119 = vcvt.s32.f32 %v118
    %v120 = vadd.f32 %v113, %v119
    %121 = vset.pattern.permute.xlu0 10
    %122 = vperm.xlu0 %121, %v48
    %v123 = vpop.permute.xlu0 %122
    %vm124 = vcmp.eq.s32.totalorder %v123, %v50
    %v125 = vsel %vm124, 1, 0
    %v126 = vcvt.s32.f32 %v125
    %v127 = vadd.f32 %v120, %v126
    %128 = vset.pattern.permute.xlu0 11
    %129 = vperm.xlu0 %128, %v48
    %v130 = vpop.permute.xlu0 %129
    %vm131 = vcmp.eq.s32.totalorder %v130, %v50
    %v132 = vsel %vm131, 1, 0
    %v133 = vcvt.s32.f32 %v132
    %v134 = vadd.f32 %v127, %v133
    %135 = vset.pattern.permute.xlu0 12
    %136 = vperm.xlu0 %135, %v48
    %v137 = vpop.permute.xlu0 %136
    %vm138 = vcmp.eq.s32.totalorder %v137, %v50
    %v139 = vsel %vm138, 1, 0
    %v140 = vcvt.s32.f32 %v139
    %v141 = vadd.f32 %v134, %v140
    %142 = vset.pattern.permute.xlu0 13
    %143 = vperm.xlu0 %142, %v48
    %v144 = vpop.permute.xlu0 %143
    %vm145 = vcmp.eq.s32.totalorder %v144, %v50
    %v146 = vsel %vm145, 1, 0
    %v147 = vcvt.s32.f32 %v146
    %v148 = vadd.f32 %v141, %v147
    %149 = vset.pattern.permute.xlu0 14
    %150 = vperm.xlu0 %149, %v48
    %v151 = vpop.permute.xlu0 %150
    %vm152 = vcmp.eq.s32.totalorder %v151, %v50
    %v153 = vsel %vm152, 1, 0
    %v154 = vcvt.s32.f32 %v153
    %v155 = vadd.f32 %v148, %v154
    %156 = vset.pattern.permute.xlu0 15
    %157 = vperm.xlu0 %156, %v48
    %v158 = vpop.permute.xlu0 %157
    %vm159 = vcmp.eq.s32.totalorder %v158, %v50
    %v160 = vsel %vm159, 1, 0
    %v161 = vcvt.s32.f32 %v160
    %v162 = vadd.f32 %v155, %v161
    %v163 = vpack.c.bf16 %v162, %v162
    %v164 = vld [vmem:[#allocation5] sm:$0xf]
    %v165 = vld [vmem:[#allocation5 + $0x4] sm:$0xf]
    %v166 = vld [vmem:[#allocation5 + $0x8] sm:$0xf]
    %v167 = vld [vmem:[#allocation5 + $0xc] sm:$0xf]
    %v168 = vld [vmem:[#allocation5 + $0x10] sm:$0xf]
    %v169 = vld [vmem:[#allocation5 + $0x14] sm:$0xf]
    %v170 = vld [vmem:[#allocation5 + $0x18] sm:$0xf]
    %v171 = vld [vmem:[#allocation5 + $0x1c] sm:$0xf]
    %v172 = vld [vmem:[#allocation5 + $0x20] sm:$0xf]
    %v173 = vld [vmem:[#allocation5 + $0x24] sm:$0xf]
    %v174 = vld [vmem:[#allocation5 + $0x28] sm:$0xf]
    %v175 = vld [vmem:[#allocation5 + $0x2c] sm:$0xf]
    %v176 = vld [vmem:[#allocation5 + $0x30] sm:$0xf]
    %v177 = vld [vmem:[#allocation5 + $0x34] sm:$0xf]
    %v178 = vld [vmem:[#allocation5 + $0x38] sm:$0xf]
    %v179 = vld [vmem:[#allocation5 + $0x3c] sm:$0xf]
    %v196 = vunpack.c.l.b16 %v164
    %v197 = vunpack.c.l.b16 %v165
    %v198 = vunpack.c.l.b16 %v166
    %v199 = vunpack.c.l.b16 %v167
    %v200 = vunpack.c.l.b16 %v168
    %v201 = vunpack.c.l.b16 %v169
    %v202 = vunpack.c.l.b16 %v170
    %v203 = vunpack.c.l.b16 %v171
    %v204 = vunpack.c.l.b16 %v172
    %v205 = vunpack.c.l.b16 %v173
    %v206 = vunpack.c.l.b16 %v174
    %v207 = vunpack.c.l.b16 %v175
    %v208 = vunpack.c.l.b16 %v176
    %v209 = vunpack.c.l.b16 %v177
    %v210 = vunpack.c.l.b16 %v178
    %v211 = vunpack.c.l.b16 %v179
    %v212 = vpack.c.b16 %v197, %v196
    %v213 = vpack.c.b16 %v199, %v198
    %v214 = vpack.c.b16 %v201, %v200
    %v215 = vpack.c.b16 %v203, %v202
    %v216 = vpack.c.b16 %v205, %v204
    %v217 = vpack.c.b16 %v207, %v206
    %v218 = vpack.c.b16 %v209, %v208
    %v219 = vpack.c.b16 %v211, %v210
    %228 = vmatprep.subr.bf16.mxu0 0
    %229 = vmatpush1.bf16.msra.mxu0 %v212
    %230 = vmatprep.subr.bf16.mxu0 0
    %231 = vmatpush1.bf16.msra.mxu0 %v213
    %232 = vmatprep.subr.bf16.mxu0 0
    %233 = vmatpush1.bf16.msra.mxu0 %v214
    %234 = vmatprep.subr.bf16.mxu0 0
    %235 = vmatpush1.bf16.msra.mxu0 %v215
    %236 = vmatprep.subr.bf16.mxu0 0
    %237 = vmatpush1.bf16.msra.mxu0 %v216
    %238 = vmatprep.subr.bf16.mxu0 0
    %239 = vmatpush1.bf16.msra.mxu0 %v217
    %240 = vmatprep.subr.bf16.mxu0 0
    %241 = vmatpush1.bf16.msra.mxu0 %v218
    %242 = vmatprep.subr.bf16.mxu0 0
    %243 = vmatpush1.bf16.msra.mxu0 %v219
    %244 = vmatprep.subr.bf16.mxu0 0
    %245 = vmatpush1.bf16.msra.mxu0 0
    %246 = vmatprep.subr.bf16.mxu0 0
    %247 = vmatpush1.bf16.msra.mxu0 0
    %248 = vmatprep.subr.bf16.mxu0 0
    %249 = vmatpush1.bf16.msra.mxu0 0
    %250 = vmatprep.subr.bf16.mxu0 0
    %251 = vmatpush1.bf16.msra.mxu0 0
    %252 = vmatprep.subr.bf16.mxu0 0
    %253 = vmatpush1.bf16.msra.mxu0 0
    %254 = vmatprep.subr.bf16.mxu0 0
    %255 = vmatpush1.bf16.msra.mxu0 0
    %256 = vmatprep.subr.bf16.mxu0 0
    %257 = vmatpush1.bf16.msra.mxu0 0
    %258 = vmatprep.subr.bf16.mxu0 0
    %259 = vmatpush1.bf16.msra.mxu0 0
    %260 = vmatprep.mubr.bf16.mxu0 0
    %261 = vmatmul.mubr.bf16.gmra.mrb[0].mxu0 %v163
    %v262 = vpop.f32.mrb[0].mxu0
    %v263 = vadd.f32 0.0, %v262
    %v264 = vpop.f32.mrb[0].mxu0
    %v265 = vpop.f32.mrb[0].mxu0
    %v266 = vpop.f32.mrb[0].mxu0
    %267 = vdwg.mxu0
    %v268 = vld [vmem:[%s2] sm:$0x1]
    %v269 = vld [vmem:[%s3] sm:$0x1]
    %v270 = vld [vmem:[%s4] sm:$0x1]
    %v271 = vmul.f32 %v263, 0.125
    %v273 = vlaneseq
    %v274 = vshrl.u32 %v273, 7
    %v275 = vsub.s32 0, %v274
    %v276 = vrot.slane %v268, %v275
    %v278 = vadd.f32 %v271, %v276
    %279 = vadd.xlane.f32.xlu0 %v278
    %v280 = vpop.xlane.xlu0 %279
    %v281 = vmul.f32 %v280, 0.03125
    %vm282 = vcmp.lt.s32.totalorder %v50, 32
    %v283 = vsub.f32 %v278, %v281
    %v284 = vsel %vm282, 1, 0
    %vm285 = vcmp.eq.s32.totalorder %v284, 1
    %v286 = vsel %vm285, %v283, 0.0
    %v287 = vmul.f32 %v286, %v286
    %288 = vadd.xlane.f32.xlu0 %v287
    %v289 = vpop.xlane.xlu0 %288
    %v290 = vmul.f32 %v289, 0.03125
    %v291 = vadd.f32 %v290, 1e-05
    %v292 = vrsqrt.pop %v291
    %v293 = vmul.f32 %v283, %v292
    %v295 = vlaneseq
    %v296 = vshrl.u32 %v295, 7
    %v297 = vsub.s32 0, %v296
    %v298 = vrot.slane %v269, %v297
    %v300 = vmul.f32 %v293, %v298
    %v302 = vlaneseq
    %v303 = vshrl.u32 %v302, 7
    %v304 = vsub.s32 0, %v303
    %v305 = vrot.slane %v270, %v304
    %v307 = vadd.f32 %v300, %v305
    %308 = vst [vmem:[#allocation7] sm:$0xff] %v307
    // Predicated region
    $region30: #{tpu_custom_call.1} parent=1 // pred_check
      _
    $region31: #{tpu_custom_call.1} parent=1 // pred_check_branch
      %310 = sbr.rel (0) target = $region33
    $region32: #{tpu_custom_call.1} parent=1 // pred_region
      %s312 = ssub.s32 128, 128
      %313 = vsyncadd [#allocation4], %s312
      %s315 = sshll.u32 [#allocation7], 4
      %s316 = int_to_ptr.vmem [resolvable:$true] %s315
      %318 = dma.vmem_to_hbm [thread:$0]  %s316, 128, %s5, [#allocation4]
    $region33: #{tpu_custom_call.1} parent=1 // pred_fallthru
      _
    // Predicated region
    $region34: #{tpu_custom_call.1} parent=1 // pred_check
      _
    $region35: #{tpu_custom_call.1} parent=1 // pred_check_branch
      %320 = sbr.rel (0) target = $region37
    $region36: #{tpu_custom_call.1} parent=1 // pred_region
      %321 = dma.done [#allocation4], 128
    $region37: #{tpu_custom_call.1} parent=1 // pred_fallthru
      _
    %322 = vsyncpa [#allocation3], 1
    %323 = vsyncpa [#allocation6], 1
    %324 = vsyncpa [#allocation4], 1

</llo_original>
